<compile_context>
chip_gen: v7x
topology: tpu7x:2x2x1
jax: 0.10.0
libtpu: 0.0.40
codegen_flags: <defaults>
</compile_context>

<pallas_src>
import functools

import jax
import jax.numpy as jnp
from jax.experimental import pallas as pl
from jax.experimental.pallas import tpu as pltpu

LANE = 128          # lane width (last-dim granularity)
SUBLANE_BF16 = 16   # bf16 rows per sublane tile


def _round_up(x, m):
    return (x + m - 1) // m * m


# ---------------------------------------------------------------------------
# Kernel body: one (tb, Dp) slab of x against fully resident weights.
# ---------------------------------------------------------------------------
def soundmlp_kernel(x_ref, w1_ref, b1_ref, w2_ref, b2_ref, out_ref):
    # fc1: bf16 x bf16 -> f32 accumulate on the MXU.
    h = jnp.dot(x_ref[...], w1_ref[...], preferred_element_type=jnp.float32)
    # bias + sigmoid in f32 (VPU / EUP; v5e has no bf16 VPU path).
    h = jax.nn.sigmoid(h + b1_ref[...])
    # fc2: lane-padded (256 x 128) MXU dot, f32 accumulate.
    out = jnp.dot(h.astype(w2_ref.dtype), w2_ref[...],
                  preferred_element_type=jnp.float32)
    out_ref[...] = (out + b2_ref[...]).astype(out_ref.dtype)


# ---------------------------------------------------------------------------
# One-time (model-load) weight preparation: pad + cast OUTSIDE the per-call
# path so no per-forward HBM pass over the weights is spent on it.
# ---------------------------------------------------------------------------
def prepare_params(w1, b1, w2, b2):
    """w1:(D,256), b1:(256,), w2:(256,2), b2:(2,) f32 -> padded bf16/f32."""
    D, H = w1.shape
    O = w2.shape[1]
    Dp = _round_up(D, LANE)
    Op = LANE                                   # lane-dense fc2 cols / output
    w1p = jnp.zeros((Dp, H), jnp.bfloat16).at[:D, :].set(w1.astype(jnp.bfloat16))
    w2p = jnp.zeros((H, Op), jnp.bfloat16).at[:, :O].set(w2.astype(jnp.bfloat16))
    b1p = b1.astype(jnp.float32).reshape(1, H)
    b2p = jnp.zeros((1, Op), jnp.float32).at[0, :O].set(b2.astype(jnp.float32))
    return w1p, b1p, w2p, b2p


def _vmem_budget_bytes():
    """~80% of this generation's physical VMEM (v5e/v6e 128 MiB, v7x 64 MiB)."""
    try:
        cap = int(pltpu.get_tpu_info().vmem_capacity_bytes)
    except Exception:
        cap = 64 * 1024 * 1024          # conservative fallback (v7x per-core)
    return int(0.8 * cap)


@functools.partial(jax.jit, static_argnames=("out_features", "tile_b"))
def soundmlp_forward(x, w1p, b1p, w2p, b2p, *, out_features=2, tile_b=512):
    """SoundMLP forward (eval mode: dropout == identity).

    x   : (B, D) bf16 preferred (f32 accepted, cast once); D arbitrary.
    w1p : (Dp, 256) bf16, b1p: (1, 256) f32    (from prepare_params)
    w2p : (256, 128) bf16, b2p: (1, 128) f32
    returns (B, out_features) float32
    """
    B, D = x.shape
    Dp, H = w1p.shape
    Op = w2p.shape[1]
    assert Dp >= D and Dp % LANE == 0 and Op == LANE

    # ---- batch tile: >=2 grid steps when the batch allows (both v7x TCs),
    #      multiples of 16 (bf16 sublanes), clamped to the VMEM budget. ------
    B16 = _round_up(B, SUBLANE_BF16)
    tb = min(tile_b, max(SUBLANE_BF16, _round_up(-(-B16 // 2), SUBLANE_BF16)))

    vmem_cap = _vmem_budget_bytes()

    def vmem_needed(t):
        return (2 * t * Dp * 2          # x tiles: double-buffered, bf16
                + Dp * H * 2            # W1: resident, single-buffered, bf16
                + H * Op * 2            # W2: resident, bf16
                + 2 * t * Op * 4        # out tiles: double-buffered, f32
                + (H + Op) * 4          # biases, f32
                + t * H * 6)            # in-kernel h (f32) + bf16 cast of h

    while tb > SUBLANE_BF16 and vmem_needed(tb) > vmem_cap:
        tb = max(SUBLANE_BF16, _round_up(tb // 2, SUBLANE_BF16))

    Bp = _round_up(B16, tb)

    # ---- x: producer should already supply bf16; only zero-pad remainders
    #      (numerically exact). ----------------------------------------------
    xb = x if x.dtype == jnp.bfloat16 else x.astype(jnp.bfloat16)
    if (Bp - B) or (Dp - D):
        xb = jnp.pad(xb, ((0, Bp - B), (0, Dp - D)))

    vmem_limit = int(min(vmem_cap,
                         max(vmem_needed(tb) + 8 * 1024 * 1024,
                             32 * 1024 * 1024)))

    cost = pl.CostEstimate(
        flops=2 * Bp * Dp * H + 2 * Bp * H * Op,
        transcendentals=Bp * H,
        bytes_accessed=(Bp * Dp * 2 + Dp * H * 2 + H * Op * 2
                        + (H + Op) * 4 + Bp * Op * 4),
    )

    # Resident operands (constant index_map): single pipeline buffer.
    resident = functools.partial(pl.BlockSpec, pipeline_mode=pl.Buffered(1))

    out_padded = pl.pallas_call(
        soundmlp_kernel,
        out_shape=jax.ShapeDtypeStruct((Bp, Op), jnp.float32),
        grid_spec=pltpu.PrefetchScalarGridSpec(
            num_scalar_prefetch=0,
            grid=(Bp // tb,),
            in_specs=[
                pl.BlockSpec((tb, Dp), lambda i: (i, 0)),   # x batch tile
                resident((Dp, H), lambda i: (0, 0)),        # W1 resident
                resident((1, H), lambda i: (0, 0)),         # b1 resident
                resident((H, Op), lambda i: (0, 0)),        # W2 resident
                resident((1, Op), lambda i: (0, 0)),        # b2 resident
            ],
            out_specs=pl.BlockSpec((tb, Op), lambda i: (i, 0)),
        ),
        compiler_params=pltpu.CompilerParams(
            dimension_semantics=("parallel",),
            vmem_limit_bytes=vmem_limit,
        ),
        cost_estimate=cost,
    )(xb, w1p, b1p, w2p, b2p)

    return out_padded[:B, :out_features]


def reference_forward(x, w1, b1, w2, b2):
    h = jax.nn.sigmoid(x @ w1 + b1)
    return h @ w2 + b2


if __name__ == "__main__":
    # Small shapes consistent with the module (input_size is a ctor arg).
    # D deliberately NOT a multiple of 128 to exercise the padding path.
    B = 8      # batch
    D = 612    # input_size
    H = 256    # fc1 hidden
    O = 2      # fc2 out

    key = jax.random.PRNGKey(0)
    kx, kw1, kb1, kw2, kb2 = jax.random.split(key, 5)

    x = jax.random.normal(kx, (B, D), dtype=jnp.float32)
    # Deterministic param init (roughly matching torch's uniform fan-in scale).
    lim1 = 1.0 / (D ** 0.5)
    lim2 = 1.0 / (H ** 0.5)
    w1 = jax.random.uniform(kw1, (D, H), jnp.float32, -lim1, lim1)
    b1 = jax.random.uniform(kb1, (H,), jnp.float32, -lim1, lim1)
    w2 = jax.random.uniform(kw2, (H, O), jnp.float32, -lim2, lim2)
    b2 = jax.random.uniform(kb2, (O,), jnp.float32, -lim2, lim2)

    # Model-load-time weight prep (padded + bf16) -- NOT in the per-call path.
    w1p, b1p, w2p, b2p = jax.block_until_ready(prepare_params(w1, b1, w2, b2))

    # Producer supplies x already in bf16 (halves HBM on the dominant operand).
    x_bf16 = x.astype(jnp.bfloat16)

    out = soundmlp_forward(x_bf16, w1p, b1p, w2p, b2p, out_features=O)
    out = jax.block_until_ready(out)

    ref = reference_forward(x, w1, b1, w2, b2)
    assert out.shape == (B, O)
    # bf16 inputs -> loosened tolerance vs the f32 reference (expected).
    assert jnp.allclose(out, ref, atol=2e-2, rtol=2e-2), "mismatch vs reference"

    print("KERNEL_OK")
</pallas_src>

<mosaic_0001>
module attributes {stable_mosaic.version = 11 : i64} {
  func.func @soundmlp_kernel(%arg0: i32, %arg1: memref<16x640xbf16, #tpu.memory_space<vmem>>, %arg2: memref<640x256xbf16, #tpu.memory_space<vmem>>, %arg3: memref<1x256xf32, #tpu.memory_space<vmem>>, %arg4: memref<256x128xbf16, #tpu.memory_space<vmem>>, %arg5: memref<1x128xf32, #tpu.memory_space<vmem>>, %arg6: memref<16x128xf32, #tpu.memory_space<vmem>>) attributes {dimension_semantics = [#tpu.dimension_semantics<parallel>], iteration_bounds = array<i64: 1>, scalar_prefetch = 0 : i64, scratch_operands = 0 : i64, tpu.core_type = #tpu.core_type<tc>, window_params = [{transform_indices = @transform_0, window_bounds = array<i64: 16, 640>}, {pipeline_mode = #tpu.pipeline_mode<synchronous>, transform_indices = @transform_1, window_bounds = array<i64: 640, 256>}, {pipeline_mode = #tpu.pipeline_mode<synchronous>, transform_indices = @transform_2, window_bounds = array<i64: 1, 256>}, {pipeline_mode = #tpu.pipeline_mode<synchronous>, transform_indices = @transform_3, window_bounds = array<i64: 256, 128>}, {pipeline_mode = #tpu.pipeline_mode<synchronous>, transform_indices = @transform_4, window_bounds = array<i64: 1, 128>}, {transform_indices = @transform_5, window_bounds = array<i64: 16, 128>}]} {
    %c0 = arith.constant 0 : index
    %c0_0 = arith.constant 0 : index
    %0 = vector.load %arg1[%c0, %c0_0] : memref<16x640xbf16, #tpu.memory_space<vmem>>, vector<16x640xbf16>
    %c0_1 = arith.constant 0 : index
    %c0_2 = arith.constant 0 : index
    %1 = vector.load %arg2[%c0_1, %c0_2] : memref<640x256xbf16, #tpu.memory_space<vmem>>, vector<640x256xbf16>
    %cst = arith.constant dense<0.000000e+00> : vector<16x256xf32>
    %2 = tpu.matmul %0, %1, %cst {dimension_numbers = #tpu.dot_dimension_numbers<[1], [0], [0], [1], [0, 0, 1, 1], [], []>} : vector<16x640xbf16>, vector<640x256xbf16>, vector<16x256xf32> -> vector<16x256xf32>
    %c0_3 = arith.constant 0 : index
    %c0_4 = arith.constant 0 : index
    %3 = vector.load %arg3[%c0_3, %c0_4] : memref<1x256xf32, #tpu.memory_space<vmem>>, vector<1x256xf32>
    %4 = vector.broadcast %3 : vector<1x256xf32> to vector<16x256xf32>
    %5 = arith.addf %2, %4 : vector<16x256xf32>
    %6 = arith.negf %5 : vector<16x256xf32>
    %7 = math.exp %6 : vector<16x256xf32>
    %cst_5 = arith.constant 1.000000e+00 : f32
    %8 = vector.broadcast %cst_5 : f32 to vector<16x256xf32>
    %9 = arith.addf %8, %7 : vector<16x256xf32>
    %10 = arith.divf %8, %9 : vector<16x256xf32>
    %11 = arith.truncf %10 : vector<16x256xf32> to vector<16x256xbf16>
    %c0_6 = arith.constant 0 : index
    %c0_7 = arith.constant 0 : index
    %12 = vector.load %arg4[%c0_6, %c0_7] : memref<256x128xbf16, #tpu.memory_space<vmem>>, vector<256x128xbf16>
    %cst_8 = arith.constant dense<0.000000e+00> : vector<16x128xf32>
    %13 = tpu.matmul %11, %12, %cst_8 {dimension_numbers = #tpu.dot_dimension_numbers<[1], [0], [0], [1], [0, 0, 1, 1], [], []>} : vector<16x256xbf16>, vector<256x128xbf16>, vector<16x128xf32> -> vector<16x128xf32>
    %c0_9 = arith.constant 0 : index
    %c0_10 = arith.constant 0 : index
    %14 = vector.load %arg5[%c0_9, %c0_10] : memref<1x128xf32, #tpu.memory_space<vmem>>, vector<1x128xf32>
    %15 = vector.broadcast %14 : vector<1x128xf32> to vector<16x128xf32>
    %16 = arith.addf %13, %15 : vector<16x128xf32>
    %c0_11 = arith.constant 0 : index
    %c0_12 = arith.constant 0 : index
    %17 = vector.load %arg6[%c0_11, %c0_12] : memref<16x128xf32, #tpu.memory_space<vmem>>, vector<16x128xf32>
    tpu.vector_store %arg6[%c0_11, %c0_12], %16 {strides = array<i32>} : memref<16x128xf32, #tpu.memory_space<vmem>>, vector<16x128xf32>,
    return
  }
  func.func @transform_0(%arg0: i32) -> (i32, i32) {
    %c0_i32 = arith.constant 0 : i32
    %c0_i32_0 = arith.constant 0 : i32
    return %arg0, %c0_i32 : i32, i32
  }
  func.func @transform_1(%arg0: i32) -> (i32, i32) {
    %c0_i32 = arith.constant 0 : i32
    %c0_i32_0 = arith.constant 0 : i32
    %c0_i32_1 = arith.constant 0 : i32
    return %c0_i32, %c0_i32_0 : i32, i32
  }
  func.func @transform_2(%arg0: i32) -> (i32, i32) {
    %c0_i32 = arith.constant 0 : i32
    %c0_i32_0 = arith.constant 0 : i32
    %c0_i32_1 = arith.constant 0 : i32
    return %c0_i32, %c0_i32_0 : i32, i32
  }
  func.func @transform_3(%arg0: i32) -> (i32, i32) {
    %c0_i32 = arith.constant 0 : i32
    %c0_i32_0 = arith.constant 0 : i32
    %c0_i32_1 = arith.constant 0 : i32
    return %c0_i32, %c0_i32_0 : i32, i32
  }
  func.func @transform_4(%arg0: i32) -> (i32, i32) {
    %c0_i32 = arith.constant 0 : i32
    %c0_i32_0 = arith.constant 0 : i32
    %c0_i32_1 = arith.constant 0 : i32
    return %c0_i32, %c0_i32_0 : i32, i32
  }
  func.func @transform_5(%arg0: i32) -> (i32, i32) {
    %c0_i32 = arith.constant 0 : i32
    %c0_i32_0 = arith.constant 0 : i32
    return %arg0, %c0_i32 : i32, i32
  }
}

</mosaic_0001>

<llo_original>
// kernel: soundmlp_forward.1
$region0: #{soundmlp_forward.1}
  #allocation0 [shape = 'u32[]', space=smem, size = 0x4, offset = 0x4, fixed_abs, tag = 'smem constant byte address 0x4 - core index']
  #allocation1 [shape = 'u32[144,128]{1,0:T(1,128)}', space=vmem, size = 0x12000, scoped, tag = 'internal scratch']
  %s0 = inlined_call_operand.vmem [shape: bf16[16,640], index: 0, kind: input, shape index: {}]
  %s1 = inlined_call_operand.hbm [shape: bf16[640,256], index: 1, kind: input, shape index: {}]
  %s2 = inlined_call_operand.vmem [shape: f32[1,256], index: 2, kind: input, shape index: {}]
  %s3 = inlined_call_operand.hbm [shape: bf16[256,128], index: 3, kind: input, shape index: {}]
  %s4 = inlined_call_operand.vmem [shape: f32[1,128], index: 4, kind: input, shape index: {}]
  %s5 = inlined_call_operand.vmem [shape: f32[16,128], index: 5, kind: output, shape index: {}]
  %s6 = sld [smem:[#allocation0]]
  $region38: #{soundmlp_forward.1} parent=0
    _
  %s8 = ssub.s32 1, %s6
  %s9 = scalar_select 0, %s8, %s6
  $region1: #{soundmlp_forward.1} parent=0
    #allocation2 [shape = 'u8[327680]{0}', space=vmem, size = 0x50000, scoped, tag = 'input window, operand 1, single buffered']
    #allocation3 [shape = 's32[1]{0}', space=sflag, size = 0x4, scoped, tag = 'scoped memory for soundmlp_forward.1']
    #allocation4 [shape = 'u8[65536]{0}', space=vmem, size = 0x10000, scoped, tag = 'input window, operand 3, single buffered']
    #allocation5 [shape = 's32[1]{0}', space=sflag, size = 0x4, scoped, tag = 'scoped memory for soundmlp_forward.1']
    %10 = vsyncpa [#allocation3], 0
    %11 = vsyncpa [#allocation5], 0
    // Predicated region
    $region2: #{soundmlp_forward.1} parent=1 // pred_check
      _
    $region3: #{soundmlp_forward.1} parent=1 // pred_check_branch
      %13 = sbr.rel (0) target = $region5
    $region4: #{soundmlp_forward.1} parent=1 // pred_region
      _
    $region5: #{soundmlp_forward.1} parent=1 // pred_fallthru
      _
    // Predicated region
    $region6: #{soundmlp_forward.1} parent=1 // pred_check
      _
    $region7: #{soundmlp_forward.1} parent=1 // pred_check_branch
      %15 = sbr.rel (0) target = $region9
    $region8: #{soundmlp_forward.1} parent=1 // pred_region
      %s17 = ssub.s32 10240, 10240
      %18 = vsyncadd [#allocation3], %s17
      %s19 = sshll.u32 [#allocation2], 4
      %s20 = int_to_ptr.vmem [resolvable:$true] %s19
      %25 = dma.hbm_to_vmem [thread:$0]  %s1, 10240, %s20, [#allocation3], 128, 128, 8
    $region9: #{soundmlp_forward.1} parent=1 // pred_fallthru
      _
    // Predicated region
    $region10: #{soundmlp_forward.1} parent=1 // pred_check
      _
    $region11: #{soundmlp_forward.1} parent=1 // pred_check_branch
      %27 = sbr.rel (0) target = $region13
    $region12: #{soundmlp_forward.1} parent=1 // pred_region
      _
    $region13: #{soundmlp_forward.1} parent=1 // pred_fallthru
      _
    // Predicated region
    $region14: #{soundmlp_forward.1} parent=1 // pred_check
      _
    $region15: #{soundmlp_forward.1} parent=1 // pred_check_branch
      %29 = sbr.rel (0) target = $region17
    $region16: #{soundmlp_forward.1} parent=1 // pred_region
      %s31 = ssub.s32 2048, 2048
      %32 = vsyncadd [#allocation5], %s31
      %s33 = sshll.u32 [#allocation4], 4
      %s34 = int_to_ptr.vmem [resolvable:$true] %s33
      %39 = dma.hbm_to_vmem [thread:$0]  %s3, 2048, %s34, [#allocation5], 64, 64, 4
    $region17: #{soundmlp_forward.1} parent=1 // pred_fallthru
      _
    // Predicated region
    $region18: #{soundmlp_forward.1} parent=1 // pred_check
      _
    $region19: #{soundmlp_forward.1} parent=1 // pred_check_branch
      %41 = sbr.rel (0) target = $region21
    $region20: #{soundmlp_forward.1} parent=1 // pred_region
      _
    $region21: #{soundmlp_forward.1} parent=1 // pred_fallthru
      _
    // Predicated region
    $region22: #{soundmlp_forward.1} parent=1 // pred_check
      _
    $region23: #{soundmlp_forward.1} parent=1 // pred_check_branch
      %43 = sbr.rel (0) target = $region25
    $region24: #{soundmlp_forward.1} parent=1 // pred_region
      %44 = dma.done [#allocation3], 10240
    $region25: #{soundmlp_forward.1} parent=1 // pred_fallthru
      _
    // Predicated region
    $region26: #{soundmlp_forward.1} parent=1 // pred_check
      _
    $region27: #{soundmlp_forward.1} parent=1 // pred_check_branch
      %46 = sbr.rel (0) target = $region29
    $region28: #{soundmlp_forward.1} parent=1 // pred_region
      %47 = dma.done [#allocation5], 2048
    $region29: #{soundmlp_forward.1} parent=1 // pred_fallthru
      _
    %v49 = vld [vmem:[%s0] sm:$0xff]
    %v50 = vld [vmem:[%s0 + $0x8] sm:$0xff]
    %v51 = vld [vmem:[%s0 + $0x10] sm:$0xf]
    %v52 = vld [vmem:[%s0 + $0x14] sm:$0xff]
    %v53 = vld [vmem:[%s0 + $0x1c] sm:$0xff]
    %v54 = vld [vmem:[%s0 + $0x24] sm:$0xf]
    %v55 = vld [vmem:[#allocation2] sm:$0xff]
    %v56 = vld [vmem:[#allocation2 + $0x8] sm:$0xff]
    %v57 = vld [vmem:[#allocation2 + $0x10] sm:$0xff]
    %v58 = vld [vmem:[#allocation2 + $0x18] sm:$0xff]
    %v59 = vld [vmem:[#allocation2 + $0x20] sm:$0xff]
    %v60 = vld [vmem:[#allocation2 + $0x28] sm:$0xff]
    %v61 = vld [vmem:[#allocation2 + $0x30] sm:$0xff]
    %v62 = vld [vmem:[#allocation2 + $0x38] sm:$0xff]
    %v63 = vld [vmem:[#allocation2 + $0x40] sm:$0xff]
    %v64 = vld [vmem:[#allocation2 + $0x48] sm:$0xff]
    %v65 = vld [vmem:[#allocation2 + $0x50] sm:$0xff]
    %v66 = vld [vmem:[#allocation2 + $0x58] sm:$0xff]
    %v67 = vld [vmem:[#allocation2 + $0x60] sm:$0xff]
    %v68 = vld [vmem:[#allocation2 + $0x68] sm:$0xff]
    %v69 = vld [vmem:[#allocation2 + $0x70] sm:$0xff]
    %v70 = vld [vmem:[#allocation2 + $0x78] sm:$0xff]
    %v71 = vld [vmem:[#allocation2 + $0x80] sm:$0xff]
    %v72 = vld [vmem:[#allocation2 + $0x88] sm:$0xff]
    %v73 = vld [vmem:[#allocation2 + $0x90] sm:$0xff]
    %v74 = vld [vmem:[#allocation2 + $0x98] sm:$0xff]
    %v75 = vld [vmem:[#allocation2 + $0xa0] sm:$0xff]
    %v76 = vld [vmem:[#allocation2 + $0xa8] sm:$0xff]
    %v77 = vld [vmem:[#allocation2 + $0xb0] sm:$0xff]
    %v78 = vld [vmem:[#allocation2 + $0xb8] sm:$0xff]
    %v79 = vld [vmem:[#allocation2 + $0xc0] sm:$0xff]
    %v80 = vld [vmem:[#allocation2 + $0xc8] sm:$0xff]
    %v81 = vld [vmem:[#allocation2 + $0xd0] sm:$0xff]
    %v82 = vld [vmem:[#allocation2 + $0xd8] sm:$0xff]
    %v83 = vld [vmem:[#allocation2 + $0xe0] sm:$0xff]
    %v84 = vld [vmem:[#allocation2 + $0xe8] sm:$0xff]
    %v85 = vld [vmem:[#allocation2 + $0xf0] sm:$0xff]
    %v86 = vld [vmem:[#allocation2 + $0xf8] sm:$0xff]
    %v87 = vld [vmem:[#allocation2 + $0x100] sm:$0xff]
    %v88 = vld [vmem:[#allocation2 + $0x108] sm:$0xff]
    %v89 = vld [vmem:[#allocation2 + $0x110] sm:$0xff]
    %v90 = vld [vmem:[#allocation2 + $0x118] sm:$0xff]
    %v91 = vld [vmem:[#allocation2 + $0x120] sm:$0xff]
    %v92 = vld [vmem:[#allocation2 + $0x128] sm:$0xff]
    %v93 = vld [vmem:[#allocation2 + $0x130] sm:$0xff]
    %v94 = vld [vmem:[#allocation2 + $0x138] sm:$0xff]
    %v95 = vld [vmem:[#allocation2 + $0x140] sm:$0xff]
    %v96 = vld [vmem:[#allocation2 + $0x148] sm:$0xff]
    %v97 = vld [vmem:[#allocation2 + $0x150] sm:$0xff]
    %v98 = vld [vmem:[#allocation2 + $0x158] sm:$0xff]
    %v99 = vld [vmem:[#allocation2 + $0x160] sm:$0xff]
    %v100 = vld [vmem:[#allocation2 + $0x168] sm:$0xff]
    %v101 = vld [vmem:[#allocation2 + $0x170] sm:$0xff]
    %v102 = vld [vmem:[#allocation2 + $0x178] sm:$0xff]
    %v103 = vld [vmem:[#allocation2 + $0x180] sm:$0xff]
    %v104 = vld [vmem:[#allocation2 + $0x188] sm:$0xff]
    %v105 = vld [vmem:[#allocation2 + $0x190] sm:$0xff]
    %v106 = vld [vmem:[#allocation2 + $0x198] sm:$0xff]
    %v107 = vld [vmem:[#allocation2 + $0x1a0] sm:$0xff]
    %v108 = vld [vmem:[#allocation2 + $0x1a8] sm:$0xff]
    %v109 = vld [vmem:[#allocation2 + $0x1b0] sm:$0xff]
    %v110 = vld [vmem:[#allocation2 + $0x1b8] sm:$0xff]
    %v111 = vld [vmem:[#allocation2 + $0x1c0] sm:$0xff]
    %v112 = vld [vmem:[#allocation2 + $0x1c8] sm:$0xff]
    %v113 = vld [vmem:[#allocation2 + $0x1d0] sm:$0xff]
    %v114 = vld [vmem:[#allocation2 + $0x1d8] sm:$0xff]
    %v115 = vld [vmem:[#allocation2 + $0x1e0] sm:$0xff]
    %v116 = vld [vmem:[#allocation2 + $0x1e8] sm:$0xff]
    %v117 = vld [vmem:[#allocation2 + $0x1f0] sm:$0xff]
    %v118 = vld [vmem:[#allocation2 + $0x1f8] sm:$0xff]
    %v119 = vld [vmem:[#allocation2 + $0x200] sm:$0xff]
    %v120 = vld [vmem:[#allocation2 + $0x208] sm:$0xff]
    %v121 = vld [vmem:[#allocation2 + $0x210] sm:$0xff]
    %v122 = vld [vmem:[#allocation2 + $0x218] sm:$0xff]
    %v123 = vld [vmem:[#allocation2 + $0x220] sm:$0xff]
    %v124 = vld [vmem:[#allocation2 + $0x228] sm:$0xff]
    %v125 = vld [vmem:[#allocation2 + $0x230] sm:$0xff]
    %v126 = vld [vmem:[#allocation2 + $0x238] sm:$0xff]
    %v127 = vld [vmem:[#allocation2 + $0x240] sm:$0xff]
    %v128 = vld [vmem:[#allocation2 + $0x248] sm:$0xff]
    %v129 = vld [vmem:[#allocation2 + $0x250] sm:$0xff]
    %v130 = vld [vmem:[#allocation2 + $0x258] sm:$0xff]
    %v131 = vld [vmem:[#allocation2 + $0x260] sm:$0xff]
    %v132 = vld [vmem:[#allocation2 + $0x268] sm:$0xff]
    %v133 = vld [vmem:[#allocation2 + $0x270] sm:$0xff]
    %v134 = vld [vmem:[#allocation2 + $0x278] sm:$0xff]
    %v135 = vld [vmem:[%s2] sm:$0x3]
    %v137 = vlaneseq
    %v138 = vshrl.u32 %v137, 7
    %v139 = vsub.s32 0, %v138
    %v140 = vrot.slane %v135, %v139
    %v141 = vlaneseq
    %v142 = vshrl.u32 %v141, 7
    %v143 = vsub.s32 1, %v142
    %v144 = vrot.slane %v135, %v143
    %v153 = vunpack.c.l.b16 %v49
    %v154 = vunpack.c.h.b16 %v49
    %v155 = vunpack.c.l.b16 %v50
    %v156 = vunpack.c.h.b16 %v50
    %v157 = vunpack.c.l.b16 %v51
    %v158 = vunpack.c.l.b16 %v52
    %v159 = vunpack.c.h.b16 %v52
    %v160 = vunpack.c.l.b16 %v53
    %v161 = vunpack.c.h.b16 %v53
    %v162 = vunpack.c.l.b16 %v54
    %v163 = vpack.c.b16 %v158, %v153
    %v164 = vpack.c.b16 %v159, %v154
    %v165 = vpack.c.b16 %v160, %v155
    %v166 = vpack.c.b16 %v161, %v156
    %v167 = vpack.c.b16 %v162, %v157
    %v253 = vunpack.c.l.b16 %v55
    %v254 = vunpack.c.h.b16 %v55
    %v255 = vunpack.c.l.b16 %v56
    %v256 = vunpack.c.h.b16 %v56
    %v257 = vunpack.c.l.b16 %v57
    %v258 = vunpack.c.h.b16 %v57
    %v259 = vunpack.c.l.b16 %v58
    %v260 = vunpack.c.h.b16 %v58
    %v261 = vunpack.c.l.b16 %v59
    %v262 = vunpack.c.h.b16 %v59
    %v263 = vunpack.c.l.b16 %v60
    %v264 = vunpack.c.h.b16 %v60
    %v265 = vunpack.c.l.b16 %v61
    %v266 = vunpack.c.h.b16 %v61
    %v267 = vunpack.c.l.b16 %v62
    %v268 = vunpack.c.h.b16 %v62
    %v269 = vunpack.c.l.b16 %v63
    %v270 = vunpack.c.h.b16 %v63
    %v271 = vunpack.c.l.b16 %v64
    %v272 = vunpack.c.h.b16 %v64
    %v273 = vunpack.c.l.b16 %v65
    %v274 = vunpack.c.h.b16 %v65
    %v275 = vunpack.c.l.b16 %v66
    %v276 = vunpack.c.h.b16 %v66
    %v277 = vunpack.c.l.b16 %v67
    %v278 = vunpack.c.h.b16 %v67
    %v279 = vunpack.c.l.b16 %v68
    %v280 = vunpack.c.h.b16 %v68
    %v281 = vunpack.c.l.b16 %v69
    %v282 = vunpack.c.h.b16 %v69
    %v283 = vunpack.c.l.b16 %v70
    %v284 = vunpack.c.h.b16 %v70
    %v285 = vunpack.c.l.b16 %v71
    %v286 = vunpack.c.h.b16 %v71
    %v287 = vunpack.c.l.b16 %v72
    %v288 = vunpack.c.h.b16 %v72
    %v289 = vunpack.c.l.b16 %v73
    %v290 = vunpack.c.h.b16 %v73
    %v291 = vunpack.c.l.b16 %v74
    %v292 = vunpack.c.h.b16 %v74
    %v293 = vunpack.c.l.b16 %v75
    %v294 = vunpack.c.h.b16 %v75
    %v295 = vunpack.c.l.b16 %v76
    %v296 = vunpack.c.h.b16 %v76
    %v297 = vunpack.c.l.b16 %v77
    %v298 = vunpack.c.h.b16 %v77
    %v299 = vunpack.c.l.b16 %v78
    %v300 = vunpack.c.h.b16 %v78
    %v301 = vunpack.c.l.b16 %v79
    %v302 = vunpack.c.h.b16 %v79
    %v303 = vunpack.c.l.b16 %v80
    %v304 = vunpack.c.h.b16 %v80
    %v305 = vunpack.c.l.b16 %v81
    %v306 = vunpack.c.h.b16 %v81
    %v307 = vunpack.c.l.b16 %v82
    %v308 = vunpack.c.h.b16 %v82
    %v309 = vunpack.c.l.b16 %v83
    %v310 = vunpack.c.h.b16 %v83
    %v311 = vunpack.c.l.b16 %v84
    %v312 = vunpack.c.h.b16 %v84
    %v313 = vunpack.c.l.b16 %v85
    %v314 = vunpack.c.h.b16 %v85
    %v315 = vunpack.c.l.b16 %v86
    %v316 = vunpack.c.h.b16 %v86
    %v317 = vunpack.c.l.b16 %v87
    %v318 = vunpack.c.h.b16 %v87
    %v319 = vunpack.c.l.b16 %v88
    %v320 = vunpack.c.h.b16 %v88
    %v321 = vunpack.c.l.b16 %v89
    %v322 = vunpack.c.h.b16 %v89
    %v323 = vunpack.c.l.b16 %v90
    %v324 = vunpack.c.h.b16 %v90
    %v325 = vunpack.c.l.b16 %v91
    %v326 = vunpack.c.h.b16 %v91
    %v327 = vunpack.c.l.b16 %v92
    %v328 = vunpack.c.h.b16 %v92
    %v329 = vunpack.c.l.b16 %v93
    %v330 = vunpack.c.h.b16 %v93
    %v331 = vunpack.c.l.b16 %v94
    %v332 = vunpack.c.h.b16 %v94
    %v333 = vunpack.c.l.b16 %v95
    %v334 = vunpack.c.h.b16 %v95
    %v335 = vunpack.c.l.b16 %v96
    %v336 = vunpack.c.h.b16 %v96
    %v337 = vunpack.c.l.b16 %v97
    %v338 = vunpack.c.h.b16 %v97
    %v339 = vunpack.c.l.b16 %v98
    %v340 = vunpack.c.h.b16 %v98
    %v341 = vunpack.c.l.b16 %v99
    %v342 = vunpack.c.h.b16 %v99
    %v343 = vunpack.c.l.b16 %v100
    %v344 = vunpack.c.h.b16 %v100
    %v345 = vunpack.c.l.b16 %v101
    %v346 = vunpack.c.h.b16 %v101
    %v347 = vunpack.c.l.b16 %v102
    %v348 = vunpack.c.h.b16 %v102
    %v349 = vunpack.c.l.b16 %v103
    %v350 = vunpack.c.h.b16 %v103
    %v351 = vunpack.c.l.b16 %v104
    %v352 = vunpack.c.h.b16 %v104
    %v353 = vunpack.c.l.b16 %v105
    %v354 = vunpack.c.h.b16 %v105
    %v355 = vunpack.c.l.b16 %v106
    %v356 = vunpack.c.h.b16 %v106
    %v357 = vunpack.c.l.b16 %v107
    %v358 = vunpack.c.h.b16 %v107
    %v359 = vunpack.c.l.b16 %v108
    %v360 = vunpack.c.h.b16 %v108
    %v361 = vunpack.c.l.b16 %v109
    %v362 = vunpack.c.h.b16 %v109
    %v363 = vunpack.c.l.b16 %v110
    %v364 = vunpack.c.h.b16 %v110
    %v365 = vunpack.c.l.b16 %v111
    %v366 = vunpack.c.h.b16 %v111
    %v367 = vunpack.c.l.b16 %v112
    %v368 = vunpack.c.h.b16 %v112
    %v369 = vunpack.c.l.b16 %v113
    %v370 = vunpack.c.h.b16 %v113
    %v371 = vunpack.c.l.b16 %v114
    %v372 = vunpack.c.h.b16 %v114
    %v373 = vunpack.c.l.b16 %v115
    %v374 = vunpack.c.h.b16 %v115
    %v375 = vunpack.c.l.b16 %v116
    %v376 = vunpack.c.h.b16 %v116
    %v377 = vunpack.c.l.b16 %v117
    %v378 = vunpack.c.h.b16 %v117
    %v379 = vunpack.c.l.b16 %v118
    %v380 = vunpack.c.h.b16 %v118
    %v381 = vunpack.c.l.b16 %v119
    %v382 = vunpack.c.h.b16 %v119
    %v383 = vunpack.c.l.b16 %v120
    %v384 = vunpack.c.h.b16 %v120
    %v385 = vunpack.c.l.b16 %v121
    %v386 = vunpack.c.h.b16 %v121
    %v387 = vunpack.c.l.b16 %v122
    %v388 = vunpack.c.h.b16 %v122
    %v389 = vunpack.c.l.b16 %v123
    %v390 = vunpack.c.h.b16 %v123
    %v391 = vunpack.c.l.b16 %v124
    %v392 = vunpack.c.h.b16 %v124
    %v393 = vunpack.c.l.b16 %v125
    %v394 = vunpack.c.h.b16 %v125
    %v395 = vunpack.c.l.b16 %v126
    %v396 = vunpack.c.h.b16 %v126
    %v397 = vunpack.c.l.b16 %v127
    %v398 = vunpack.c.h.b16 %v127
    %v399 = vunpack.c.l.b16 %v128
    %v400 = vunpack.c.h.b16 %v128
    %v401 = vunpack.c.l.b16 %v129
    %v402 = vunpack.c.h.b16 %v129
    %v403 = vunpack.c.l.b16 %v130
    %v404 = vunpack.c.h.b16 %v130
    %v405 = vunpack.c.l.b16 %v131
    %v406 = vunpack.c.h.b16 %v131
    %v407 = vunpack.c.l.b16 %v132
    %v408 = vunpack.c.h.b16 %v132
    %v409 = vunpack.c.l.b16 %v133
    %v410 = vunpack.c.h.b16 %v133
    %v411 = vunpack.c.l.b16 %v134
    %v412 = vunpack.c.h.b16 %v134
    %v413 = vpack.c.b16 %v255, %v253
    %v414 = vpack.c.b16 %v256, %v254
    %v415 = vpack.c.b16 %v259, %v257
    %v416 = vpack.c.b16 %v260, %v258
    %v417 = vpack.c.b16 %v263, %v261
    %v418 = vpack.c.b16 %v264, %v262
    %v419 = vpack.c.b16 %v267, %v265
    %v420 = vpack.c.b16 %v268, %v266
    %v421 = vpack.c.b16 %v271, %v269
    %v422 = vpack.c.b16 %v272, %v270
    %v423 = vpack.c.b16 %v275, %v273
    %v424 = vpack.c.b16 %v276, %v274
    %v425 = vpack.c.b16 %v279, %v277
    %v426 = vpack.c.b16 %v280, %v278
    %v427 = vpack.c.b16 %v283, %v281
    %v428 = vpack.c.b16 %v284, %v282
    %v429 = vpack.c.b16 %v287, %v285
    %v430 = vpack.c.b16 %v288, %v286
    %v431 = vpack.c.b16 %v291, %v289
    %v432 = vpack.c.b16 %v292, %v290
    %v433 = vpack.c.b16 %v295, %v293
    %v434 = vpack.c.b16 %v296, %v294
    %v435 = vpack.c.b16 %v299, %v297
    %v436 = vpack.c.b16 %v300, %v298
    %v437 = vpack.c.b16 %v303, %v301
    %v438 = vpack.c.b16 %v304, %v302
    %v439 = vpack.c.b16 %v307, %v305
    %v440 = vpack.c.b16 %v308, %v306
    %v441 = vpack.c.b16 %v311, %v309
    %v442 = vpack.c.b16 %v312, %v310
    %v443 = vpack.c.b16 %v315, %v313
    %v444 = vpack.c.b16 %v316, %v314
    %v445 = vpack.c.b16 %v319, %v317
    %v446 = vpack.c.b16 %v320, %v318
    %v447 = vpack.c.b16 %v323, %v321
    %v448 = vpack.c.b16 %v324, %v322
    %v449 = vpack.c.b16 %v327, %v325
    %v450 = vpack.c.b16 %v328, %v326
    %v451 = vpack.c.b16 %v331, %v329
    %v452 = vpack.c.b16 %v332, %v330
    %v453 = vpack.c.b16 %v335, %v333
    %v454 = vpack.c.b16 %v336, %v334
    %v455 = vpack.c.b16 %v339, %v337
    %v456 = vpack.c.b16 %v340, %v338
    %v457 = vpack.c.b16 %v343, %v341
    %v458 = vpack.c.b16 %v344, %v342
    %v459 = vpack.c.b16 %v347, %v345
    %v460 = vpack.c.b16 %v348, %v346
    %v461 = vpack.c.b16 %v351, %v349
    %v462 = vpack.c.b16 %v352, %v350
    %v463 = vpack.c.b16 %v355, %v353
    %v464 = vpack.c.b16 %v356, %v354
    %v465 = vpack.c.b16 %v359, %v357
    %v466 = vpack.c.b16 %v360, %v358
    %v467 = vpack.c.b16 %v363, %v361
    %v468 = vpack.c.b16 %v364, %v362
    %v469 = vpack.c.b16 %v367, %v365
    %v470 = vpack.c.b16 %v368, %v366
    %v471 = vpack.c.b16 %v371, %v369
    %v472 = vpack.c.b16 %v372, %v370
    %v473 = vpack.c.b16 %v375, %v373
    %v474 = vpack.c.b16 %v376, %v374
    %v475 = vpack.c.b16 %v379, %v377
    %v476 = vpack.c.b16 %v380, %v378
    %v477 = vpack.c.b16 %v383, %v381
    %v478 = vpack.c.b16 %v384, %v382
    %v479 = vpack.c.b16 %v387, %v385
    %v480 = vpack.c.b16 %v388, %v386
    %v481 = vpack.c.b16 %v391, %v389
    %v482 = vpack.c.b16 %v392, %v390
    %v483 = vpack.c.b16 %v395, %v393
    %v484 = vpack.c.b16 %v396, %v394
    %v485 = vpack.c.b16 %v399, %v397
    %v486 = vpack.c.b16 %v400, %v398
    %v487 = vpack.c.b16 %v403, %v401
    %v488 = vpack.c.b16 %v404, %v402
    %v489 = vpack.c.b16 %v407, %v405
    %v490 = vpack.c.b16 %v408, %v406
    %v491 = vpack.c.b16 %v411, %v409
    %v492 = vpack.c.b16 %v412, %v410
    %573 = vmatprep.subr.bf16.mxu0 %v414
    %574 = vmatpush1.bf16.msra.mxu0 %v413
    %575 = vmatprep.subr.bf16.mxu0 %v416
    %576 = vmatpush1.bf16.msra.mxu0 %v415
    %577 = vmatprep.subr.bf16.mxu0 %v418
    %578 = vmatpush1.bf16.msra.mxu0 %v417
    %579 = vmatprep.subr.bf16.mxu0 %v420
    %580 = vmatpush1.bf16.msra.mxu0 %v419
    %581 = vmatprep.subr.bf16.mxu0 %v422
    %582 = vmatpush1.bf16.msra.mxu0 %v421
    %583 = vmatprep.subr.bf16.mxu0 %v424
    %584 = vmatpush1.bf16.msra.mxu0 %v423
    %585 = vmatprep.subr.bf16.mxu0 %v426
    %586 = vmatpush1.bf16.msra.mxu0 %v425
    %587 = vmatprep.subr.bf16.mxu0 %v428
    %588 = vmatpush1.bf16.msra.mxu0 %v427
    %589 = vmatprep.subr.bf16.mxu0 %v430
    %590 = vmatpush1.bf16.msra.mxu0 %v429
    %591 = vmatprep.subr.bf16.mxu0 %v432
    %592 = vmatpush1.bf16.msra.mxu0 %v431
    %593 = vmatprep.subr.bf16.mxu0 %v434
    %594 = vmatpush1.bf16.msra.mxu0 %v433
    %595 = vmatprep.subr.bf16.mxu0 %v436
    %596 = vmatpush1.bf16.msra.mxu0 %v435
    %597 = vmatprep.subr.bf16.mxu0 %v438
    %598 = vmatpush1.bf16.msra.mxu0 %v437
    %599 = vmatprep.subr.bf16.mxu0 %v440
    %600 = vmatpush1.bf16.msra.mxu0 %v439
    %601 = vmatprep.subr.bf16.mxu0 %v442
    %602 = vmatpush1.bf16.msra.mxu0 %v441
    %603 = vmatprep.subr.bf16.mxu0 %v444
    %604 = vmatpush1.bf16.msra.mxu0 %v443
    %605 = vmatprep.mubr.bf16.mxu0 %v164
    %606 = vmatmul.mubr.bf16.gmra.mrb[0].mxu0 %v163
    %v607 = vpop.f32.mrb[0].mxu0
    %v608 = vadd.f32 %v140, %v607
    %v609 = vpop.f32.mrb[0].mxu0
    %v610 = vadd.f32 %v144, %v609
    %v611 = vpop.f32.mrb[0].mxu0
    %v612 = vadd.f32 %v140, %v611
    %v613 = vpop.f32.mrb[0].mxu0
    %v614 = vadd.f32 %v144, %v613
    %615 = vdwg.mxu0
    %616 = vmatprep.subr.bf16.mxu0 %v446
    %617 = vmatpush1.bf16.msra.mxu0 %v445
    %618 = vmatprep.subr.bf16.mxu0 %v448
    %619 = vmatpush1.bf16.msra.mxu0 %v447
    %620 = vmatprep.subr.bf16.mxu0 %v450
    %621 = vmatpush1.bf16.msra.mxu0 %v449
    %622 = vmatprep.subr.bf16.mxu0 %v452
    %623 = vmatpush1.bf16.msra.mxu0 %v451
    %624 = vmatprep.subr.bf16.mxu0 %v454
    %625 = vmatpush1.bf16.msra.mxu0 %v453
    %626 = vmatprep.subr.bf16.mxu0 %v456
    %627 = vmatpush1.bf16.msra.mxu0 %v455
    %628 = vmatprep.subr.bf16.mxu0 %v458
    %629 = vmatpush1.bf16.msra.mxu0 %v457
    %630 = vmatprep.subr.bf16.mxu0 %v460
    %631 = vmatpush1.bf16.msra.mxu0 %v459
    %632 = vmatprep.subr.bf16.mxu0 %v462
    %633 = vmatpush1.bf16.msra.mxu0 %v461
    %634 = vmatprep.subr.bf16.mxu0 %v464
    %635 = vmatpush1.bf16.msra.mxu0 %v463
    %636 = vmatprep.subr.bf16.mxu0 %v466
    %637 = vmatpush1.bf16.msra.mxu0 %v465
    %638 = vmatprep.subr.bf16.mxu0 %v468
    %639 = vmatpush1.bf16.msra.mxu0 %v467
    %640 = vmatprep.subr.bf16.mxu0 %v470
    %641 = vmatpush1.bf16.msra.mxu0 %v469
    %642 = vmatprep.subr.bf16.mxu0 %v472
    %643 = vmatpush1.bf16.msra.mxu0 %v471
    %644 = vmatprep.subr.bf16.mxu0 %v474
    %645 = vmatpush1.bf16.msra.mxu0 %v473
    %646 = vmatprep.subr.bf16.mxu0 %v476
    %647 = vmatpush1.bf16.msra.mxu0 %v475
    %648 = vmatprep.mubr.bf16.mxu0 %v166
    %649 = vmatmul.mubr.bf16.gmra.mrb[0].mxu0 %v165
    %v650 = vpop.f32.mrb[0].mxu0
    %v651 = vadd.f32 %v608, %v650
    %v652 = vpop.f32.mrb[0].mxu0
    %v653 = vadd.f32 %v610, %v652
    %v654 = vpop.f32.mrb[0].mxu0
    %v655 = vadd.f32 %v612, %v654
    %v656 = vpop.f32.mrb[0].mxu0
    %v657 = vadd.f32 %v614, %v656
    %658 = vdwg.mxu0
    %659 = vmatprep.subr.bf16.mxu0 %v478
    %660 = vmatpush1.bf16.msra.mxu0 %v477
    %661 = vmatprep.subr.bf16.mxu0 %v480
    %662 = vmatpush1.bf16.msra.mxu0 %v479
    %663 = vmatprep.subr.bf16.mxu0 %v482
    %664 = vmatpush1.bf16.msra.mxu0 %v481
    %665 = vmatprep.subr.bf16.mxu0 %v484
    %666 = vmatpush1.bf16.msra.mxu0 %v483
    %667 = vmatprep.subr.bf16.mxu0 %v486
    %668 = vmatpush1.bf16.msra.mxu0 %v485
    %669 = vmatprep.subr.bf16.mxu0 %v488
    %670 = vmatpush1.bf16.msra.mxu0 %v487
    %671 = vmatprep.subr.bf16.mxu0 %v490
    %672 = vmatpush1.bf16.msra.mxu0 %v489
    %673 = vmatprep.subr.bf16.mxu0 %v492
    %674 = vmatpush1.bf16.msra.mxu0 %v491
    %675 = vmatprep.subr.bf16.mxu0 0
    %676 = vmatpush1.bf16.msra.mxu0 0
    %677 = vmatprep.subr.bf16.mxu0 0
    %678 = vmatpush1.bf16.msra.mxu0 0
    %679 = vmatprep.subr.bf16.mxu0 0
    %680 = vmatpush1.bf16.msra.mxu0 0
    %681 = vmatprep.subr.bf16.mxu0 0
    %682 = vmatpush1.bf16.msra.mxu0 0
    %683 = vmatprep.subr.bf16.mxu0 0
    %684 = vmatpush1.bf16.msra.mxu0 0
    %685 = vmatprep.subr.bf16.mxu0 0
    %686 = vmatpush1.bf16.msra.mxu0 0
    %687 = vmatprep.subr.bf16.mxu0 0
    %688 = vmatpush1.bf16.msra.mxu0 0
    %689 = vmatprep.subr.bf16.mxu0 0
    %690 = vmatpush1.bf16.msra.mxu0 0
    %691 = vmatprep.mubr.bf16.mxu0 0
    %692 = vmatmul.mubr.bf16.gmra.mrb[0].mxu0 %v167
    %v693 = vpop.f32.mrb[0].mxu0
    %v694 = vadd.f32 %v651, %v693
    %v695 = vpop.f32.mrb[0].mxu0
    %v696 = vadd.f32 %v653, %v695
    %v697 = vpop.f32.mrb[0].mxu0
    %v698 = vadd.f32 %v655, %v697
    %v699 = vpop.f32.mrb[0].mxu0
    %v700 = vadd.f32 %v657, %v699
    %701 = vdwg.mxu0
    %v702 = vxor.u32 %v694, 2147483648
    %v703 = vxor.u32 %v696, 2147483648
    %v704 = vxor.u32 %v698, 2147483648
    %v705 = vxor.u32 %v700, 2147483648
    %v706 = vmul.f32 %v702, 1.442695
    %v707 = vpow.pop %v706
    %v708 = vmul.f32 %v703, 1.442695
    %v709 = vpow.pop %v708
    %v710 = vmul.f32 %v704, 1.442695
    %v711 = vpow.pop %v710
    %v712 = vmul.f32 %v705, 1.442695
    %v713 = vpow.pop %v712
    %v714 = vadd.f32 %v707, 1.0
    %v715 = vadd.f32 %v709, 1.0
    %v716 = vadd.f32 %v711, 1.0
    %v717 = vadd.f32 %v713, 1.0
    %v718 = vrcp.pop %v714
    %v719 = vmul.f32 1.0, %v718
    %v720 = vrcp.pop %v715
    %v721 = vmul.f32 1.0, %v720
    %v722 = vrcp.pop %v716
    %v723 = vmul.f32 1.0, %v722
    %v724 = vrcp.pop %v717
    %v725 = vmul.f32 1.0, %v724
    %v726 = vpack.c.bf16 %v723, %v719
    %v727 = vpack.c.bf16 %v725, %v721
    %v728 = vld [vmem:[#allocation4] sm:$0xf]
    %v729 = vld [vmem:[#allocation4 + $0x4] sm:$0xf]
    %v730 = vld [vmem:[#allocation4 + $0x8] sm:$0xf]
    %v731 = vld [vmem:[#allocation4 + $0xc] sm:$0xf]
    %v732 = vld [vmem:[#allocation4 + $0x10] sm:$0xf]
    %v733 = vld [vmem:[#allocation4 + $0x14] sm:$0xf]
    %v734 = vld [vmem:[#allocation4 + $0x18] sm:$0xf]
    %v735 = vld [vmem:[#allocation4 + $0x1c] sm:$0xf]
    %v736 = vld [vmem:[#allocation4 + $0x20] sm:$0xf]
    %v737 = vld [vmem:[#allocation4 + $0x24] sm:$0xf]
    %v738 = vld [vmem:[#allocation4 + $0x28] sm:$0xf]
    %v739 = vld [vmem:[#allocation4 + $0x2c] sm:$0xf]
    %v740 = vld [vmem:[#allocation4 + $0x30] sm:$0xf]
    %v741 = vld [vmem:[#allocation4 + $0x34] sm:$0xf]
    %v742 = vld [vmem:[#allocation4 + $0x38] sm:$0xf]
    %v743 = vld [vmem:[#allocation4 + $0x3c] sm:$0xf]
    %v744 = vld [vmem:[#allocation4 + $0x40] sm:$0xf]
    %v745 = vld [vmem:[#allocation4 + $0x44] sm:$0xf]
    %v746 = vld [vmem:[#allocation4 + $0x48] sm:$0xf]
    %v747 = vld [vmem:[#allocation4 + $0x4c] sm:$0xf]
    %v748 = vld [vmem:[#allocation4 + $0x50] sm:$0xf]
    %v749 = vld [vmem:[#allocation4 + $0x54] sm:$0xf]
    %v750 = vld [vmem:[#allocation4 + $0x58] sm:$0xf]
    %v751 = vld [vmem:[#allocation4 + $0x5c] sm:$0xf]
    %v752 = vld [vmem:[#allocation4 + $0x60] sm:$0xf]
    %v753 = vld [vmem:[#allocation4 + $0x64] sm:$0xf]
    %v754 = vld [vmem:[#allocation4 + $0x68] sm:$0xf]
    %v755 = vld [vmem:[#allocation4 + $0x6c] sm:$0xf]
    %v756 = vld [vmem:[#allocation4 + $0x70] sm:$0xf]
    %v757 = vld [vmem:[#allocation4 + $0x74] sm:$0xf]
    %v758 = vld [vmem:[#allocation4 + $0x78] sm:$0xf]
    %v759 = vld [vmem:[#allocation4 + $0x7c] sm:$0xf]
    %v760 = vld [vmem:[%s4] sm:$0x1]
    %v762 = vlaneseq
    %v763 = vshrl.u32 %v762, 7
    %v764 = vsub.s32 0, %v763
    %v765 = vrot.slane %v760, %v764
    %v799 = vunpack.c.l.b16 %v728
    %v800 = vunpack.c.l.b16 %v729
    %v801 = vunpack.c.l.b16 %v730
    %v802 = vunpack.c.l.b16 %v731
    %v803 = vunpack.c.l.b16 %v732
    %v804 = vunpack.c.l.b16 %v733
    %v805 = vunpack.c.l.b16 %v734
    %v806 = vunpack.c.l.b16 %v735
    %v807 = vunpack.c.l.b16 %v736
    %v808 = vunpack.c.l.b16 %v737
    %v809 = vunpack.c.l.b16 %v738
    %v810 = vunpack.c.l.b16 %v739
    %v811 = vunpack.c.l.b16 %v740
    %v812 = vunpack.c.l.b16 %v741
    %v813 = vunpack.c.l.b16 %v742
    %v814 = vunpack.c.l.b16 %v743
    %v815 = vunpack.c.l.b16 %v744
    %v816 = vunpack.c.l.b16 %v745
    %v817 = vunpack.c.l.b16 %v746
    %v818 = vunpack.c.l.b16 %v747
    %v819 = vunpack.c.l.b16 %v748
    %v820 = vunpack.c.l.b16 %v749
    %v821 = vunpack.c.l.b16 %v750
    %v822 = vunpack.c.l.b16 %v751
    %v823 = vunpack.c.l.b16 %v752
    %v824 = vunpack.c.l.b16 %v753
    %v825 = vunpack.c.l.b16 %v754
    %v826 = vunpack.c.l.b16 %v755
    %v827 = vunpack.c.l.b16 %v756
    %v828 = vunpack.c.l.b16 %v757
    %v829 = vunpack.c.l.b16 %v758
    %v830 = vunpack.c.l.b16 %v759
    %v831 = vpack.c.b16 %v800, %v799
    %v832 = vpack.c.b16 %v802, %v801
    %v833 = vpack.c.b16 %v804, %v803
    %v834 = vpack.c.b16 %v806, %v805
    %v835 = vpack.c.b16 %v808, %v807
    %v836 = vpack.c.b16 %v810, %v809
    %v837 = vpack.c.b16 %v812, %v811
    %v838 = vpack.c.b16 %v814, %v813
    %v839 = vpack.c.b16 %v816, %v815
    %v840 = vpack.c.b16 %v818, %v817
    %v841 = vpack.c.b16 %v820, %v819
    %v842 = vpack.c.b16 %v822, %v821
    %v843 = vpack.c.b16 %v824, %v823
    %v844 = vpack.c.b16 %v826, %v825
    %v845 = vpack.c.b16 %v828, %v827
    %v846 = vpack.c.b16 %v830, %v829
    %863 = vmatprep.subr.bf16.mxu0 0
    %864 = vmatpush1.bf16.msra.mxu0 %v831
    %865 = vmatprep.subr.bf16.mxu0 0
    %866 = vmatpush1.bf16.msra.mxu0 %v832
    %867 = vmatprep.subr.bf16.mxu0 0
    %868 = vmatpush1.bf16.msra.mxu0 %v833
    %869 = vmatprep.subr.bf16.mxu0 0
    %870 = vmatpush1.bf16.msra.mxu0 %v834
    %871 = vmatprep.subr.bf16.mxu0 0
    %872 = vmatpush1.bf16.msra.mxu0 %v835
    %873 = vmatprep.subr.bf16.mxu0 0
    %874 = vmatpush1.bf16.msra.mxu0 %v836
    %875 = vmatprep.subr.bf16.mxu0 0
    %876 = vmatpush1.bf16.msra.mxu0 %v837
    %877 = vmatprep.subr.bf16.mxu0 0
    %878 = vmatpush1.bf16.msra.mxu0 %v838
    %879 = vmatprep.subr.bf16.mxu0 0
    %880 = vmatpush1.bf16.msra.mxu0 %v839
    %881 = vmatprep.subr.bf16.mxu0 0
    %882 = vmatpush1.bf16.msra.mxu0 %v840
    %883 = vmatprep.subr.bf16.mxu0 0
    %884 = vmatpush1.bf16.msra.mxu0 %v841
    %885 = vmatprep.subr.bf16.mxu0 0
    %886 = vmatpush1.bf16.msra.mxu0 %v842
    %887 = vmatprep.subr.bf16.mxu0 0
    %888 = vmatpush1.bf16.msra.mxu0 %v843
    %889 = vmatprep.subr.bf16.mxu0 0
    %890 = vmatpush1.bf16.msra.mxu0 %v844
    %891 = vmatprep.subr.bf16.mxu0 0
    %892 = vmatpush1.bf16.msra.mxu0 %v845
    %893 = vmatprep.subr.bf16.mxu0 0
    %894 = vmatpush1.bf16.msra.mxu0 %v846
    %895 = vmatprep.mubr.bf16.mxu0 %v727
    %896 = vmatmul.mubr.bf16.gmra.mrb[0].mxu0 %v726
    %v897 = vpop.f32.mrb[0].mxu0
    %v898 = vadd.f32 %v765, %v897
    %v899 = vpop.f32.mrb[0].mxu0
    %v900 = vpop.f32.mrb[0].mxu0
    %v901 = vadd.f32 %v765, %v900
    %v902 = vpop.f32.mrb[0].mxu0
    %903 = vdwg.mxu0
    %904 = vst [vmem:[%s5] sm:$0xff] %v898
    %905 = vst [vmem:[%s5 + $0x8] sm:$0xff] %v901
    // Predicated region
    $region30: #{soundmlp_forward.1} parent=1 // pred_check
      _
    $region31: #{soundmlp_forward.1} parent=1 // pred_check_branch
      %907 = sbr.rel (0) target = $region33
    $region32: #{soundmlp_forward.1} parent=1 // pred_region
      _
    $region33: #{soundmlp_forward.1} parent=1 // pred_fallthru
      _
    // Predicated region
    $region34: #{soundmlp_forward.1} parent=1 // pred_check
      _
    $region35: #{soundmlp_forward.1} parent=1 // pred_check_branch
      %909 = sbr.rel (0) target = $region37
    $region36: #{soundmlp_forward.1} parent=1 // pred_region
      _
    $region37: #{soundmlp_forward.1} parent=1 // pred_fallthru
      _
    %910 = vsyncpa [#allocation3], 1
    %911 = vsyncpa [#allocation5], 1

</llo_original>
